<compile_context>
chip_gen: v6e
topology: v6e:2x2x1
jax: 0.10.0
libtpu: 0.0.40
codegen_flags: <defaults>
</compile_context>

<pallas_src>
import functools

import jax
import jax.numpy as jnp
from jax.experimental import pallas as pl
from jax.experimental.pallas import tpu as pltpu


def upsample_conv_kernel(x_ref, wt_ref, b_ref, o_ref):
    # x_ref : [tm, C]    wt_ref: [C, C]  (already transposed: in x out)
    # b_ref : [1, C]     o_ref : [tm, 2C]
    x = x_ref[...]
    C = x.shape[-1]
    # h = x @ W^T + b   (W^T pre-transposed in the wrapper; MXU, f32 accumulate)
    h = jnp.dot(x, wt_ref[...], preferred_element_type=jnp.float32)
    h = h + b_ref[...].astype(jnp.float32)
    # Fused concatenated output block: left half = skip (x), right half = h.
    o_ref[:, :C] = x.astype(o_ref.dtype)
    o_ref[:, C:] = h.astype(o_ref.dtype)


def _round_up(a, b):
    return ((a + b - 1) // b) * b


def _sublane_multiple(dtype):
    # 8 rows for 4-byte, 16 for 2-byte, 32 for 1-byte dtypes.
    return max(8, 32 // jnp.dtype(dtype).itemsize)


def _vmem_budget_bytes():
    # Generation-aware budget: ~60% of physical VMEM, capped at 40 MiB so the
    # scoped limit stays well inside v7x's 64 MiB (v5e/v6e have 128 MiB).
    try:
        cap = int(pltpu.get_tpu_info().vmem_capacity_bytes)
    except Exception:
        cap = 64 << 20  # conservative (v7x) fallback
    return int(min(cap * 6 // 10, 40 << 20))


@functools.partial(jax.jit, static_argnames=("tm", "io_dtype", "out_dtype"))
def upsample_conv(x, weight, bias, *, tm=None, io_dtype=None, out_dtype=None):
    """x: [N, C], weight: [C, C] (torch Linear layout, out x in), bias: [C].

    Returns [2N, C] = torch.cat([x, x @ W.T + b], dim=1).view(-1, C).
    """
    N, C = x.shape

    if io_dtype is not None:
        # Opt-in reduced-precision I/O (note: the skip half of the output is then
        # a lossy round-trip of x if out_dtype is wider than io_dtype).
        x = x.astype(io_dtype)
        weight = weight.astype(io_dtype)
        bias = bias.astype(io_dtype)
    if out_dtype is None:
        # Output writes dominate HBM traffic -> follow io_dtype when it is set.
        out_dtype = x.dtype

    in_itemsize = jnp.dtype(x.dtype).itemsize
    out_itemsize = jnp.dtype(out_dtype).itemsize

    # One-time transpose outside the kernel (no per-grid-step XLU transpose).
    wt = weight.T
    bias2d = bias.reshape(1, C)

    # Single-buffer the resident weight only when it is big enough to matter.
    w_bytes = (C * C + C) * in_itemsize
    single_buffer_w = w_bytes >= (4 << 20)
    n_w_buf = 1 if single_buffer_w else 2

    # ---- Row tile from VMEM budget (target 2K-4K rows at C=128). ----
    sub = max(_sublane_multiple(x.dtype), _sublane_multiple(out_dtype))
    budget = _vmem_budget_bytes()
    row_bytes = 2 * C * in_itemsize + 2 * (2 * C) * out_itemsize  # dbl-buffered in+out
    tm_budget = max(sub, (budget - n_w_buf * w_bytes) // row_bytes)
    tm_budget = min(int(tm_budget), 4096)
    tm_budget = max(sub, (tm_budget // sub) * sub)
    if tm is not None:  # user override, still clamped to the VMEM budget
        tm_budget = min(tm_budget, max(sub, (int(tm) // sub) * sub))

    # Clamp to the problem size; keep grid >= 2 when possible (v7x megacore).
    # No padding: the ragged last block is handled by Pallas.
    if N <= sub:
        tm_eff = N
    else:
        tm_eff = min(tm_budget, _round_up((N + 1) // 2, sub))
    grid = (pl.cdiv(N, tm_eff),)

    # TODO(synk): if C is ever not a multiple of 128, the o_ref[:, C:] store
    # starts mid-vreg (masked stores); pad C to 128 in the wrapper in that case.

    vmem_need = (2 * tm_eff * C * in_itemsize            # x tile, double-buffered
                 + 2 * tm_eff * 2 * C * out_itemsize     # out tile, double-buffered
                 + n_w_buf * w_bytes)                    # resident W^T + bias
    vmem_limit = int(min(max(vmem_need + (4 << 20), 32 << 20), 48 << 20))

    cost = pl.CostEstimate(
        flops=2 * N * C * C,
        transcendentals=0,
        bytes_accessed=(in_itemsize * (N * C + C * C + C)
                        + out_itemsize * (N * 2 * C)),
    )

    wt_spec_kwargs = {}
    if single_buffer_w:
        wt_spec_kwargs["pipeline_mode"] = pl.Buffered(1)

    out = pl.pallas_call(
        upsample_conv_kernel,
        out_shape=jax.ShapeDtypeStruct((N, 2 * C), out_dtype),
        grid_spec=pltpu.PrefetchScalarGridSpec(
            num_scalar_prefetch=0,
            grid=grid,
            in_specs=[
                pl.BlockSpec((tm_eff, C), lambda i: (i, 0)),               # x tile
                pl.BlockSpec((C, C), lambda i: (0, 0), **wt_spec_kwargs),  # W^T (resident)
                pl.BlockSpec((1, C), lambda i: (0, 0)),                    # bias
            ],
            out_specs=pl.BlockSpec((tm_eff, 2 * C), lambda i: (i, 0)),
        ),
        compiler_params=pltpu.CompilerParams(
            dimension_semantics=("parallel",),
            vmem_limit_bytes=vmem_limit,
        ),
        cost_estimate=cost,
    )(x, wt, bias2d)

    # torch.cat([x, h], dim=1).view(-1, C)  ==  free [N, 2C] -> [2N, C] reshape.
    return out.reshape(2 * N, C)


if __name__ == "__main__":
    key = jax.random.PRNGKey(0)
    kx, kw = jax.random.split(key)

    N, C = 200, 128  # small; N deliberately not a multiple of the row tile
    x = jax.random.normal(kx, (N, C), dtype=jnp.float32)

    # Deterministic parameter init mirroring reset_parameters():
    #   weight ~ normal(), bias = 0
    weight = jax.random.normal(kw, (C, C), dtype=jnp.float32)
    bias = jnp.zeros((C,), dtype=jnp.float32)

    out = upsample_conv(x, weight, bias)
    out = jax.block_until_ready(out)

    # sanity check vs. pure-JAX reference of the torch semantics
    h_ref = x @ weight.T + bias
    ref = jnp.concatenate([x, h_ref], axis=1).reshape(-1, C)
    assert out.shape == (2 * N, C), out.shape
    assert jnp.allclose(out, ref, atol=1e-2, rtol=1e-2), float(
        jnp.max(jnp.abs(out - ref)))

    print("KERNEL_OK")
</pallas_src>

<mosaic_0001>
module attributes {stable_mosaic.version = 11 : i64} {
  func.func @upsample_conv_kernel(%arg0: i32, %arg1: memref<104x128xf32, #tpu.memory_space<vmem>>, %arg2: memref<128x128xf32, #tpu.memory_space<vmem>>, %arg3: memref<1x128xf32, #tpu.memory_space<vmem>>, %arg4: memref<104x256xf32, #tpu.memory_space<vmem>>) attributes {dimension_semantics = [#tpu.dimension_semantics<parallel>], iteration_bounds = array<i64: 2>, scalar_prefetch = 0 : i64, scratch_operands = 0 : i64, tpu.core_type = #tpu.core_type<tc>, window_params = [{transform_indices = @transform_0, window_bounds = array<i64: 104, 128>}, {pipeline_mode = #tpu.pipeline_mode<synchronous>, transform_indices = @transform_1, window_bounds = array<i64: 128, 128>}, {pipeline_mode = #tpu.pipeline_mode<synchronous>, transform_indices = @transform_2, window_bounds = array<i64: 1, 128>}, {transform_indices = @transform_3, window_bounds = array<i64: 104, 256>}]} {
    %c0 = arith.constant 0 : index
    %c0_0 = arith.constant 0 : index
    %0 = vector.load %arg1[%c0, %c0_0] : memref<104x128xf32, #tpu.memory_space<vmem>>, vector<104x128xf32>
    %c0_1 = arith.constant 0 : index
    %c0_2 = arith.constant 0 : index
    %1 = vector.load %arg2[%c0_1, %c0_2] : memref<128x128xf32, #tpu.memory_space<vmem>>, vector<128x128xf32>
    %cst = arith.constant dense<0.000000e+00> : vector<104x128xf32>
    %2 = tpu.matmul %0, %1, %cst {dimension_numbers = #tpu.dot_dimension_numbers<[1], [0], [0], [1], [0, 0, 1, 1], [], []>} : vector<104x128xf32>, vector<128x128xf32>, vector<104x128xf32> -> vector<104x128xf32>
    %c0_3 = arith.constant 0 : index
    %c0_4 = arith.constant 0 : index
    %3 = vector.load %arg3[%c0_3, %c0_4] : memref<1x128xf32, #tpu.memory_space<vmem>>, vector<1x128xf32>
    %4 = vector.broadcast %3 : vector<1x128xf32> to vector<104x128xf32>
    %5 = arith.addf %2, %4 : vector<104x128xf32>
    %c0_5 = arith.constant 0 : index
    %c0_6 = arith.constant 0 : index
    %6 = vector.load %arg4[%c0_5, %c0_6] : memref<104x256xf32, #tpu.memory_space<vmem>>, vector<104x128xf32>
    tpu.vector_store %arg4[%c0_5, %c0_6], %0 {strides = array<i32>} : memref<104x256xf32, #tpu.memory_space<vmem>>, vector<104x128xf32>,
    %c0_7 = arith.constant 0 : index
    %c128 = arith.constant 128 : index
    %7 = vector.load %arg4[%c0_7, %c128] : memref<104x256xf32, #tpu.memory_space<vmem>>, vector<104x128xf32>
    tpu.vector_store %arg4[%c0_7, %c128], %5 {strides = array<i32>} : memref<104x256xf32, #tpu.memory_space<vmem>>, vector<104x128xf32>,
    return
  }
  func.func @transform_0(%arg0: i32) -> (i32, i32) {
    %c0_i32 = arith.constant 0 : i32
    %c0_i32_0 = arith.constant 0 : i32
    return %arg0, %c0_i32 : i32, i32
  }
  func.func @transform_1(%arg0: i32) -> (i32, i32) {
    %c0_i32 = arith.constant 0 : i32
    %c0_i32_0 = arith.constant 0 : i32
    %c0_i32_1 = arith.constant 0 : i32
    return %c0_i32, %c0_i32_0 : i32, i32
  }
  func.func @transform_2(%arg0: i32) -> (i32, i32) {
    %c0_i32 = arith.constant 0 : i32
    %c0_i32_0 = arith.constant 0 : i32
    %c0_i32_1 = arith.constant 0 : i32
    return %c0_i32, %c0_i32_0 : i32, i32
  }
  func.func @transform_3(%arg0: i32) -> (i32, i32) {
    %c0_i32 = arith.constant 0 : i32
    %c0_i32_0 = arith.constant 0 : i32
    return %arg0, %c0_i32 : i32, i32
  }
}

</mosaic_0001>

<llo_original>
// kernel: upsample_conv.1
$region0: #{upsample_conv.1}
  #allocation0 [shape = 'u32[]', space=smem, size = 0x4, offset = 0x4, fixed_abs, tag = 'smem constant byte address 0x4 - core index']
  #allocation1 [shape = 'u32[144,128]{1,0:T(1,128)}', space=vmem, size = 0x12000, scoped, tag = 'internal scratch']
  %s0 = inlined_call_operand.vmem [shape: f32[200,128], index: 0, kind: input, shape index: {}]
  %s1 = inlined_call_operand.vmem [shape: f32[128,128], index: 1, kind: input, shape index: {}]
  %s2 = inlined_call_operand.vmem [shape: f32[1,128], index: 2, kind: input, shape index: {}]
  %s3 = inlined_call_operand.vmem [shape: f32[200,256], index: 3, kind: output, shape index: {}]
  %s4 = sld [smem:[#allocation0]]
  $region71: #{upsample_conv.1} parent=0
    _
  %s6 = ssub.s32 1, %s4
  %s7 = scalar_select 0, %s6, %s4
  $region1: #{upsample_conv.1} parent=0
    #allocation2 [shape = 'u8[212992]{0}', space=vmem, size = 0x34000, scoped, tag = 'output window, operand 0']
    loop: start=0, step=1, limit=4
    $region2: #{upsample_conv.1} parent=1 // loop_pre_header
      _
    $region3: #{upsample_conv.1} parent=1 // loop_header
      %s9 = sphi 0, %s13
      %p10 = scmp.ge.s32.totalorder %s9, 4
      %s19 = sphi 0, %s21
      %s22 = sphi 0, %s19
      %s23 = sphi 0, %s22
      %s39 = sphi 0, %s23
      %s43 = sphi 0, %s43
      %s45 = sphi 0, %s43
      %s46 = sphi 0, %s45
      %s60 = sphi 0, %s46
      %s64 = sphi 0, %s64
      %s66 = sphi 0, %s64
      %s67 = sphi 0, %s66
      %s81 = sphi 0, %s67
      %s87 = sphi 0, %s89
      %s90 = sphi 0, %s87
      %s91 = sphi 0, %s90
      %s107 = sphi 0, %s91
    $region4: #{upsample_conv.1} parent=1 // loop_header_branch
      %12 = sbr.rel (%p10) target = $region8
    $region5: #{upsample_conv.1} parent=1 // loop_body
      %s14 = ssub.s32 %s9, 1
      %s15 = ssub.s32 %s9, 2
      %s16 = sadd.s32 %s9, 1
      %s17 = ssub.s32 %s9, %s16
      %p18 = scmp.eq.s32.totalorder %s17, 0
      %s20 = sadd.s32 %s19, 1
      %s21 = scalar_select %p18, %s19, %s20
      %p24 = pneg %p18
      %p25 = scmp.eq.s32.totalorder %s9, 1
      %p26 = por %p24, %p25
      %p27 = scmp.ne.s32.totalorder %s19, %s22
      %p28 = scmp.eq.s32.totalorder %s9, 0
      %p29 = por %p27, %p28
      %p30 = scmp.ne.s32.totalorder %s19, %s22
      %p31 = scmp.eq.s32.totalorder %s14, 1
      %p32 = por %p30, %p31
      %p33 = scmp.ne.s32.totalorder %s22, %s23
      %p34 = scmp.eq.s32.totalorder %s14, 0
      %p35 = por %p33, %p34
      %p36 = scmp.ne.s32.totalorder %s22, %s23
      %p37 = scmp.eq.s32.totalorder %s15, 1
      %p38 = por %p36, %p37
      %p40 = scmp.ne.s32.totalorder %s23, %s39
      %p41 = scmp.eq.s32.totalorder %s15, 0
      %p42 = por %p40, %p41
      %s44 = sadd.s32 %s43, 1
      %p47 = scmp.eq.s32.totalorder %s9, 1
      %p48 = scmp.ne.s32.totalorder %s43, %s45
      %p49 = scmp.eq.s32.totalorder %s9, 0
      %p50 = por %p48, %p49
      %p51 = scmp.ne.s32.totalorder %s43, %s45
      %p52 = scmp.eq.s32.totalorder %s14, 1
      %p53 = por %p51, %p52
      %p54 = scmp.ne.s32.totalorder %s45, %s46
      %p55 = scmp.eq.s32.totalorder %s14, 0
      %p56 = por %p54, %p55
      %p57 = scmp.ne.s32.totalorder %s45, %s46
      %p58 = scmp.eq.s32.totalorder %s15, 1
      %p59 = por %p57, %p58
      %p61 = scmp.ne.s32.totalorder %s46, %s60
      %p62 = scmp.eq.s32.totalorder %s15, 0
      %p63 = por %p61, %p62
      %s65 = sadd.s32 %s64, 1
      %p68 = scmp.eq.s32.totalorder %s9, 1
      %p69 = scmp.ne.s32.totalorder %s64, %s66
      %p70 = scmp.eq.s32.totalorder %s9, 0
      %p71 = por %p69, %p70
      %p72 = scmp.ne.s32.totalorder %s64, %s66
      %p73 = scmp.eq.s32.totalorder %s14, 1
      %p74 = por %p72, %p73
      %p75 = scmp.ne.s32.totalorder %s66, %s67
      %p76 = scmp.eq.s32.totalorder %s14, 0
      %p77 = por %p75, %p76
      %p78 = scmp.ne.s32.totalorder %s66, %s67
      %p79 = scmp.eq.s32.totalorder %s15, 1
      %p80 = por %p78, %p79
      %p82 = scmp.ne.s32.totalorder %s67, %s81
      %p83 = scmp.eq.s32.totalorder %s15, 0
      %p84 = por %p82, %p83
      %s85 = ssub.s32 %s9, %s16
      %p86 = scmp.eq.s32.totalorder %s85, 0
      %s88 = sadd.s32 %s87, 1
      %s89 = scalar_select %p86, %s87, %s88
      %p92 = pneg %p86
      %p93 = scmp.eq.s32.totalorder %s9, 1
      %p94 = por %p92, %p93
      %p95 = scmp.ne.s32.totalorder %s87, %s90
      %p96 = scmp.eq.s32.totalorder %s9, 0
      %p97 = por %p95, %p96
      %p98 = scmp.ne.s32.totalorder %s87, %s90
      %p99 = scmp.eq.s32.totalorder %s14, 1
      %p100 = por %p98, %p99
      %p101 = scmp.ne.s32.totalorder %s90, %s91
      %p102 = scmp.eq.s32.totalorder %s14, 0
      %p103 = por %p101, %p102
      %p104 = scmp.ne.s32.totalorder %s90, %s91
      %p105 = scmp.eq.s32.totalorder %s15, 1
      %p106 = por %p104, %p105
      %p108 = scmp.ne.s32.totalorder %s91, %s107
      %p109 = scmp.eq.s32.totalorder %s15, 0
      %p110 = por %p108, %p109
      %p111 = scmp.le.s32.totalorder 1, %s9
      %p112 = scmp.lt.s32.totalorder %s9, 3
      %p113 = pnand %p111, %p112
      %p114 = pneg %p113
      // Predicated region
      $region9: #{upsample_conv.1} parent=5 // pred_check
        _
      $region10: #{upsample_conv.1} parent=5 // pred_check_branch
        %116 = sbr.rel (%p113) target = $region12
      $region11: #{upsample_conv.1} parent=5 // pred_region
        %s117 = ssub.s32 %s9, 1
        // Predicated region
        $region13: #{upsample_conv.1} parent=11 // pred_check
          %p118 = pneg %p56
        $region14: #{upsample_conv.1} parent=11 // pred_check_branch
          %120 = sbr.rel (%p118) target = $region16
        $region15: #{upsample_conv.1} parent=11 // pred_region
          _
        $region16: #{upsample_conv.1} parent=11 // pred_fallthru
          _
        // Predicated region
        $region17: #{upsample_conv.1} parent=11 // pred_check
          %p121 = pneg %p77
        $region18: #{upsample_conv.1} parent=11 // pred_check_branch
          %123 = sbr.rel (%p121) target = $region20
        $region19: #{upsample_conv.1} parent=11 // pred_region
          _
        $region20: #{upsample_conv.1} parent=11 // pred_fallthru
          _
      $region12: #{upsample_conv.1} parent=5 // pred_fallthru
        _
      %p124 = scmp.lt.s32.totalorder %s9, 2
      // Predicated region
      $region21: #{upsample_conv.1} parent=5 // pred_check
        %p125 = pneg %p124
      $region22: #{upsample_conv.1} parent=5 // pred_check_branch
        %127 = sbr.rel (%p125) target = $region24
      $region23: #{upsample_conv.1} parent=5 // pred_region
        // Predicated region
        $region25: #{upsample_conv.1} parent=23 // pred_check
          %p128 = pneg %p29
        $region26: #{upsample_conv.1} parent=23 // pred_check_branch
          %130 = sbr.rel (%p128) target = $region28
        $region27: #{upsample_conv.1} parent=23 // pred_region
          %s131 = smul.u32 13, %s9
          %s132 = ssub.s32 25, %s131
          %p133 = scmp.lt.s32.totalorder %s132, 13
          %s134 = scalar_select %p133, %s132, 13
          %s135 = smul.u32 128, %s134
          %p136 = scmp.lt.s32.totalorder %s131, 24
          %s137 = scalar_select %p136, %s131, 24
          %s138 = smul.addr %s137, 8
          %s139 = scalar_lea.vmem %s0, %s138
          %s140 = smul.u32 13, %s9
          %s141 = ssub.s32 25, %s140
          %p142 = scmp.lt.s32.totalorder %s141, 13
          %s143 = scalar_select %p142, %s141, 13
          %s144 = smul.u32 128, %s143
        $region28: #{upsample_conv.1} parent=23 // pred_fallthru
          _
      $region24: #{upsample_conv.1} parent=5 // pred_fallthru
        _
      %p145 = scmp.le.s32.totalorder 1, %s9
      %p146 = scmp.lt.s32.totalorder %s9, 3
      %p147 = pnand %p145, %p146
      %p148 = pneg %p147
      // Predicated region
      $region29: #{upsample_conv.1} parent=5 // pred_check
        _
      $region30: #{upsample_conv.1} parent=5 // pred_check_branch
        %150 = sbr.rel (%p147) target = $region32
      $region31: #{upsample_conv.1} parent=5 // pred_region
        %s151 = ssub.s32 %s9, 1
        %s152 = smul.u32 13, %s14
        %s153 = ssub.s32 25, %s152
        %p154 = scmp.lt.s32.totalorder %s153, 13
        %s155 = scalar_select %p154, %s153, 13
        %s156 = smul.u32 128, %s155
        %p157 = scmp.lt.s32.totalorder %s152, 24
        %s158 = scalar_select %p157, %s152, 24
        %s159 = smul.addr %s158, 8
        %s160 = scalar_lea.vmem %s0, %s159
        %p161 = pneg %p35
        %p162 = pneg %p32
        %p163 = pneg %p56
        %p164 = pneg %p53
        %p165 = pneg %p77
        %p166 = pneg %p74
        %p167 = pneg %p103
        %p168 = pneg %p100
        %s169 = sand.u32 %s90, 1
        %s170 = sand.u32 %s90, 1
        %s171 = smul.addr %s170, 208
        %s172 = scalar_lea.vmem [#allocation2], %s171
        %s173 = smul.u32 13, %s14
        %s174 = ssub.s32 25, %s173
        %p175 = scmp.lt.s32.totalorder %s174, 13
        %s176 = scalar_select %p175, %s174, 13
        %s177 = smul.u32 128, %s176
        %p178 = scmp.lt.s32.totalorder %s173, 24
        %s179 = scalar_select %p178, %s173, 24
        %s180 = smul.addr %s179, 8
        %s181 = scalar_lea.vmem %s0, %s180
        %s182 = smul.u32 13, %s14
        %s183 = ssub.s32 25, %s182
        %p184 = scmp.lt.s32.totalorder %s183, 13
        %s185 = scalar_select %p184, %s183, 13
        %s186 = smul.u32 128, %s185
        %s187 = smul.u32 13, %s14
        %s188 = ssub.s32 25, %s187
        %p189 = scmp.lt.s32.totalorder %s188, 13
        %s190 = scalar_select %p189, %s188, 13
        %s191 = smul.u32 128, %s190
        %s192 = smul.u32 %s191, 2
        %v193 = vld [vmem:[%s181] sm:$0xff]
        %v194 = vld [vmem:[%s181 + $0x8] sm:$0xff]
        %v195 = vld [vmem:[%s181 + $0x10] sm:$0xff]
        %v196 = vld [vmem:[%s181 + $0x18] sm:$0xff]
        %v197 = vld [vmem:[%s181 + $0x20] sm:$0xff]
        %v198 = vld [vmem:[%s181 + $0x28] sm:$0xff]
        %v199 = vld [vmem:[%s181 + $0x30] sm:$0xff]
        %v200 = vld [vmem:[%s181 + $0x38] sm:$0xff]
        %v201 = vld [vmem:[%s181 + $0x40] sm:$0xff]
        %v202 = vld [vmem:[%s181 + $0x48] sm:$0xff]
        %v203 = vld [vmem:[%s181 + $0x50] sm:$0xff]
        %v204 = vld [vmem:[%s181 + $0x58] sm:$0xff]
        %v205 = vld [vmem:[%s181 + $0x60] sm:$0xff]
        %v206 = vld [vmem:[%s1] sm:$0xff]
        %v207 = vld [vmem:[%s1 + $0x8] sm:$0xff]
        %v208 = vld [vmem:[%s1 + $0x10] sm:$0xff]
        %v209 = vld [vmem:[%s1 + $0x18] sm:$0xff]
        %v210 = vld [vmem:[%s1 + $0x20] sm:$0xff]
        %v211 = vld [vmem:[%s1 + $0x28] sm:$0xff]
        %v212 = vld [vmem:[%s1 + $0x30] sm:$0xff]
        %v213 = vld [vmem:[%s1 + $0x38] sm:$0xff]
        %v214 = vld [vmem:[%s1 + $0x40] sm:$0xff]
        %v215 = vld [vmem:[%s1 + $0x48] sm:$0xff]
        %v216 = vld [vmem:[%s1 + $0x50] sm:$0xff]
        %v217 = vld [vmem:[%s1 + $0x58] sm:$0xff]
        %v218 = vld [vmem:[%s1 + $0x60] sm:$0xff]
        %v219 = vld [vmem:[%s1 + $0x68] sm:$0xff]
        %v220 = vld [vmem:[%s1 + $0x70] sm:$0xff]
        %v221 = vld [vmem:[%s1 + $0x78] sm:$0xff]
        %v222 = vld [vmem:[%s2] sm:$0x1]
        %v224 = vlaneseq
        %v225 = vshrl.u32 %v224, 7
        %v226 = vsub.s32 0, %v225
        %v227 = vrot.slane %v222, %v226
        %229 = vmatprep.subr.mxu0 0.0
        %230 = vmatpush1.msra.mxu0 %v221
        %231 = vmatprep.subr.mxu0 0.0
        %232 = vmatpush1.msra.mxu0 %v220
        %233 = vmatprep.subr.mxu0 0.0
        %234 = vmatpush1.msra.mxu0 %v219
        %235 = vmatprep.subr.mxu0 0.0
        %236 = vmatpush1.msra.mxu0 %v218
        %237 = vmatprep.subr.mxu0 0.0
        %238 = vmatpush1.msra.mxu0 %v217
        %239 = vmatprep.subr.mxu0 0.0
        %240 = vmatpush1.msra.mxu0 %v216
        %241 = vmatprep.subr.mxu0 0.0
        %242 = vmatpush1.msra.mxu0 %v215
        %243 = vmatprep.subr.mxu0 0.0
        %244 = vmatpush1.msra.mxu0 %v214
        %245 = vmatprep.subr.mxu0 0.0
        %246 = vmatpush1.msra.mxu0 %v213
        %247 = vmatprep.subr.mxu0 0.0
        %248 = vmatpush1.msra.mxu0 %v212
        %249 = vmatprep.subr.mxu0 0.0
        %250 = vmatpush1.msra.mxu0 %v211
        %251 = vmatprep.subr.mxu0 0.0
        %252 = vmatpush1.msra.mxu0 %v210
        %253 = vmatprep.subr.mxu0 0.0
        %254 = vmatpush1.msra.mxu0 %v209
        %255 = vmatprep.subr.mxu0 0.0
        %256 = vmatpush1.msra.mxu0 %v208
        %257 = vmatprep.subr.mxu0 0.0
        %258 = vmatpush1.msra.mxu0 %v207
        %259 = vmatprep.subr.mxu0 0.0
        %260 = vmatpush1.msra.mxu0 %v206
        %261 = vmatprep.subr.mxu0 0.0
        %262 = vmatpush2.msra.mxu0 0.0
        %263 = vmatprep.subr.mxu0 0.0
        %264 = vmatpush2.msra.mxu0 0.0
        %265 = vmatprep.subr.mxu0 0.0
        %266 = vmatpush2.msra.mxu0 0.0
        %267 = vmatprep.subr.mxu0 0.0
        %268 = vmatpush2.msra.mxu0 0.0
        %269 = vmatprep.subr.mxu0 0.0
        %270 = vmatpush2.msra.mxu0 0.0
        %271 = vmatprep.subr.mxu0 0.0
        %272 = vmatpush2.msra.mxu0 0.0
        %273 = vmatprep.subr.mxu0 0.0
        %274 = vmatpush2.msra.mxu0 0.0
        %275 = vmatprep.subr.mxu0 0.0
        %276 = vmatpush2.msra.mxu0 0.0
        %277 = vmatprep.subr.mxu0 0.0
        %278 = vmatpush2.msra.mxu0 0.0
        %279 = vmatprep.subr.mxu0 0.0
        %280 = vmatpush2.msra.mxu0 0.0
        %281 = vmatprep.subr.mxu0 0.0
        %282 = vmatpush2.msra.mxu0 0.0
        %283 = vmatprep.subr.mxu0 0.0
        %284 = vmatpush2.msra.mxu0 0.0
        %285 = vmatprep.subr.mxu0 0.0
        %286 = vmatpush2.msra.mxu0 0.0
        %287 = vmatprep.subr.mxu0 0.0
        %288 = vmatpush2.msra.mxu0 0.0
        %289 = vmatprep.subr.mxu0 0.0
        %290 = vmatpush2.msra.mxu0 0.0
        %291 = vmatprep.subr.mxu0 0.0
        %292 = vmatpush2.msra.mxu0 0.0
        %293 = vmatprep.mubr.f32.mxu0 0.0
        %294 = vmatmul.mubr.f32.gmra.mxu0 %v193
        %v295 = vpop.f32.mrf.mxu0
        %v296 = vadd.f32 %v227, %v295
        %v297 = vpop.f32.mrf.mxu0
        %298 = vmatprep.mubr.f32.mxu0 0.0
        %299 = vmatmul.mubr.f32.gmra.mxu0 %v194
        %v300 = vpop.f32.mrf.mxu0
        %v301 = vadd.f32 %v227, %v300
        %v302 = vpop.f32.mrf.mxu0
        %303 = vmatprep.mubr.f32.mxu0 0.0
        %304 = vmatmul.mubr.f32.gmra.mxu0 %v195
        %v305 = vpop.f32.mrf.mxu0
        %v306 = vadd.f32 %v227, %v305
        %v307 = vpop.f32.mrf.mxu0
        %308 = vmatprep.mubr.f32.mxu0 0.0
        %309 = vmatmul.mubr.f32.gmra.mxu0 %v196
        %v310 = vpop.f32.mrf.mxu0
        %v311 = vadd.f32 %v227, %v310
        %v312 = vpop.f32.mrf.mxu0
        %313 = vmatprep.mubr.f32.mxu0 0.0
        %314 = vmatmul.mubr.f32.gmra.mxu0 %v197
        %v315 = vpop.f32.mrf.mxu0
        %v316 = vadd.f32 %v227, %v315
        %v317 = vpop.f32.mrf.mxu0
        %318 = vmatprep.mubr.f32.mxu0 0.0
        %319 = vmatmul.mubr.f32.gmra.mxu0 %v198
        %v320 = vpop.f32.mrf.mxu0
        %v321 = vadd.f32 %v227, %v320
        %v322 = vpop.f32.mrf.mxu0
        %323 = vmatprep.mubr.f32.mxu0 0.0
        %324 = vmatmul.mubr.f32.gmra.mxu0 %v199
        %v325 = vpop.f32.mrf.mxu0
        %v326 = vadd.f32 %v227, %v325
        %v327 = vpop.f32.mrf.mxu0
        %328 = vmatprep.mubr.f32.mxu0 0.0
        %329 = vmatmul.mubr.f32.gmra.mxu0 %v200
        %v330 = vpop.f32.mrf.mxu0
        %v331 = vadd.f32 %v227, %v330
        %v332 = vpop.f32.mrf.mxu0
        %333 = vmatprep.mubr.f32.mxu0 0.0
        %334 = vmatmul.mubr.f32.gmra.mxu0 %v201
        %v335 = vpop.f32.mrf.mxu0
        %v336 = vadd.f32 %v227, %v335
        %v337 = vpop.f32.mrf.mxu0
        %338 = vmatprep.mubr.f32.mxu0 0.0
        %339 = vmatmul.mubr.f32.gmra.mxu0 %v202
        %v340 = vpop.f32.mrf.mxu0
        %v341 = vadd.f32 %v227, %v340
        %v342 = vpop.f32.mrf.mxu0
        %343 = vmatprep.mubr.f32.mxu0 0.0
        %344 = vmatmul.mubr.f32.gmra.mxu0 %v203
        %v345 = vpop.f32.mrf.mxu0
        %v346 = vadd.f32 %v227, %v345
        %v347 = vpop.f32.mrf.mxu0
        %348 = vmatprep.mubr.f32.mxu0 0.0
        %349 = vmatmul.mubr.f32.gmra.mxu0 %v204
        %v350 = vpop.f32.mrf.mxu0
        %v351 = vadd.f32 %v227, %v350
        %v352 = vpop.f32.mrf.mxu0
        %353 = vmatprep.mubr.f32.mxu0 0.0
        %354 = vmatmul.mubr.f32.gmra.mxu0 %v205
        %v355 = vpop.f32.mrf.mxu0
        %v356 = vadd.f32 %v227, %v355
        %v357 = vpop.f32.mrf.mxu0
        %358 = vdwg.mxu0
        %359 = vst [vmem:[%s172] sm:$0xff] %v193
        %360 = vst [vmem:[%s172 + $0x10] sm:$0xff] %v194
        %361 = vst [vmem:[%s172 + $0x20] sm:$0xff] %v195
        %362 = vst [vmem:[%s172 + $0x30] sm:$0xff] %v196
        %363 = vst [vmem:[%s172 + $0x40] sm:$0xff] %v197
        %364 = vst [vmem:[%s172 + $0x50] sm:$0xff] %v198
        %365 = vst [vmem:[%s172 + $0x60] sm:$0xff] %v199
        %366 = vst [vmem:[%s172 + $0x70] sm:$0xff] %v200
        %367 = vst [vmem:[%s172 + $0x80] sm:$0xff] %v201
        %368 = vst [vmem:[%s172 + $0x90] sm:$0xff] %v202
        %369 = vst [vmem:[%s172 + $0xa0] sm:$0xff] %v203
        %370 = vst [vmem:[%s172 + $0xb0] sm:$0xff] %v204
        %371 = vst [vmem:[%s172 + $0xc0] sm:$0xff] %v205
        %372 = vst [vmem:[%s172 + $0x8] sm:$0xff] %v296
        %373 = vst [vmem:[%s172 + $0x18] sm:$0xff] %v301
        %374 = vst [vmem:[%s172 + $0x28] sm:$0xff] %v306
        %375 = vst [vmem:[%s172 + $0x38] sm:$0xff] %v311
        %376 = vst [vmem:[%s172 + $0x48] sm:$0xff] %v316
        %377 = vst [vmem:[%s172 + $0x58] sm:$0xff] %v321
        %378 = vst [vmem:[%s172 + $0x68] sm:$0xff] %v326
        %379 = vst [vmem:[%s172 + $0x78] sm:$0xff] %v331
        %380 = vst [vmem:[%s172 + $0x88] sm:$0xff] %v336
        %381 = vst [vmem:[%s172 + $0x98] sm:$0xff] %v341
        %382 = vst [vmem:[%s172 + $0xa8] sm:$0xff] %v346
        %383 = vst [vmem:[%s172 + $0xb8] sm:$0xff] %v351
        %384 = vst [vmem:[%s172 + $0xc8] sm:$0xff] %v356
        %s385 = sand.u32 %s90, 1
        %s386 = sand.u32 %s90, 1
        %s387 = smul.addr %s386, 208
        %s388 = scalar_lea.vmem [#allocation2], %s387
        // Predicated region
        $region33: #{upsample_conv.1} parent=31 // pred_check
          %p389 = pneg %p100
        $region34: #{upsample_conv.1} parent=31 // pred_check_branch
          %391 = sbr.rel (%p389) target = $region36
        $region35: #{upsample_conv.1} parent=31 // pred_region
          %s392 = smul.u32 13, %s14
          %s393 = ssub.s32 25, %s392
          %p394 = scmp.lt.s32.totalorder %s393, 13
          %s395 = scalar_select %p394, %s393, 13
          %s396 = smul.u32 128, %s395
          %s397 = smul.u32 %s396, 2
          %p398 = scmp.ne.s32.totalorder 0, %s397
          %s399 = smul.addr %s392, 2
          %s400 = smul.addr %s399, 8
          %s401 = scalar_lea.vmem %s3, %s400
          // Predicated region
          $region37: #{upsample_conv.1} parent=35 // pred_check
            %p402 = pneg %p398
          $region38: #{upsample_conv.1} parent=35 // pred_check_branch
            %404 = sbr.rel (%p402) target = $region40
          $region39: #{upsample_conv.1} parent=35 // pred_region
            // Predicated region
            $region41: #{upsample_conv.1} parent=39 // pred_check
              _
            $region42: #{upsample_conv.1} parent=39 // pred_check_branch
              %406 = sbr.rel (0) target = $region44
            $region43: #{upsample_conv.1} parent=39 // pred_region
              %s407 = sdiv.u32.pop %s395, 13
              %s408 = srem.u32.pop %s395, 13
              // While loop
              $region45: #{upsample_conv.1} parent=43 // loop_pre_header
                _
              $region46: #{upsample_conv.1} parent=43 // loop_header
                %s410 = sphi 0, %s412
                %p411 = scmp.ge.s32.totalorder %s410, %s407
                %s415 = sphi 0, %s472
                %s416 = sphi %s388, %s475
                %s417 = sphi %s401, %s476
              $region47: #{upsample_conv.1} parent=43 // loop_header_branch
                %414 = sbr.rel (%p411) target = $region51
              $region48: #{upsample_conv.1} parent=43 // loop_body
                %v418 = vld [vmem:[%s416] sm:$0xff]
                %419 = vst [vmem:[%s417] sm:$0xff] %v418
                %v420 = vld [vmem:[%s416 + $0x10] sm:$0xff]
                %421 = vst [vmem:[%s417 + $0x10] sm:$0xff] %v420
                %v422 = vld [vmem:[%s416 + $0x20] sm:$0xff]
                %423 = vst [vmem:[%s417 + $0x20] sm:$0xff] %v422
                %v424 = vld [vmem:[%s416 + $0x30] sm:$0xff]
                %425 = vst [vmem:[%s417 + $0x30] sm:$0xff] %v424
                %v426 = vld [vmem:[%s416 + $0x40] sm:$0xff]
                %427 = vst [vmem:[%s417 + $0x40] sm:$0xff] %v426
                %v428 = vld [vmem:[%s416 + $0x50] sm:$0xff]
                %429 = vst [vmem:[%s417 + $0x50] sm:$0xff] %v428
                %v430 = vld [vmem:[%s416 + $0x60] sm:$0xff]
                %431 = vst [vmem:[%s417 + $0x60] sm:$0xff] %v430
                %v432 = vld [vmem:[%s416 + $0x70] sm:$0xff]
                %433 = vst [vmem:[%s417 + $0x70] sm:$0xff] %v432
                %v434 = vld [vmem:[%s416 + $0x80] sm:$0xff]
                %435 = vst [vmem:[%s417 + $0x80] sm:$0xff] %v434
                %v436 = vld [vmem:[%s416 + $0x90] sm:$0xff]
                %437 = vst [vmem:[%s417 + $0x90] sm:$0xff] %v436
                %v438 = vld [vmem:[%s416 + $0xa0] sm:$0xff]
                %439 = vst [vmem:[%s417 + $0xa0] sm:$0xff] %v438
                %v440 = vld [vmem:[%s416 + $0xb0] sm:$0xff]
                %441 = vst [vmem:[%s417 + $0xb0] sm:$0xff] %v440
                %v442 = vld [vmem:[%s416 + $0xc0] sm:$0xff]
                %443 = vst [vmem:[%s417 + $0xc0] sm:$0xff] %v442
                %v444 = vld [vmem:[%s416 + $0x8] sm:$0xff]
                %445 = vst [vmem:[%s417 + $0x8] sm:$0xff] %v444
                %v446 = vld [vmem:[%s416 + $0x18] sm:$0xff]
                %447 = vst [vmem:[%s417 + $0x18] sm:$0xff] %v446
                %v448 = vld [vmem:[%s416 + $0x28] sm:$0xff]
                %449 = vst [vmem:[%s417 + $0x28] sm:$0xff] %v448
                %v450 = vld [vmem:[%s416 + $0x38] sm:$0xff]
                %451 = vst [vmem:[%s417 + $0x38] sm:$0xff] %v450
                %v452 = vld [vmem:[%s416 + $0x48] sm:$0xff]
                %453 = vst [vmem:[%s417 + $0x48] sm:$0xff] %v452
                %v454 = vld [vmem:[%s416 + $0x58] sm:$0xff]
                %455 = vst [vmem:[%s417 + $0x58] sm:$0xff] %v454
                %v456 = vld [vmem:[%s416 + $0x68] sm:$0xff]
                %457 = vst [vmem:[%s417 + $0x68] sm:$0xff] %v456
                %v458 = vld [vmem:[%s416 + $0x78] sm:$0xff]
                %459 = vst [vmem:[%s417 + $0x78] sm:$0xff] %v458
                %v460 = vld [vmem:[%s416 + $0x88] sm:$0xff]
                %461 = vst [vmem:[%s417 + $0x88] sm:$0xff] %v460
                %v462 = vld [vmem:[%s416 + $0x98] sm:$0xff]
                %463 = vst [vmem:[%s417 + $0x98] sm:$0xff] %v462
                %v464 = vld [vmem:[%s416 + $0xa8] sm:$0xff]
                %465 = vst [vmem:[%s417 + $0xa8] sm:$0xff] %v464
                %v466 = vld [vmem:[%s416 + $0xb8] sm:$0xff]
                %467 = vst [vmem:[%s417 + $0xb8] sm:$0xff] %v466
                %v468 = vld [vmem:[%s416 + $0xc8] sm:$0xff]
                %469 = vst [vmem:[%s417 + $0xc8] sm:$0xff] %v468
                %s470 = sadd.s32 1, %s415
                %p471 = scmp.ge.s32.totalorder %s470, %s407
                %s472 = scalar_select %p471, 0, %s470
                %s473 = smul.u32 %s472, 208
                %s474 = smul.u32 %s472, 208
                %s475 = scalar_lea.vmem %s388, %s473 [#allocation2]
                %s476 = scalar_lea.vmem %s401, %s474
              $region49: #{upsample_conv.1} parent=43 // loop_footer
                %s412 = sadd.s32 %s410, 1
              $region50: #{upsample_conv.1} parent=43 // loop_footer_branch
                %409 = sbr.rel target = $region46
              $region51: #{upsample_conv.1} parent=43 // loop_exit
                _
              %s477 = sdiv.u32.pop %s395, 13
              %s478 = srem.u32.pop %s395, 13
              %s479 = smul.u32 %s477, 13
              %s480 = smul.u32 16, %s479
              %s481 = scalar_lea.vmem %s388, %s480 [#allocation2]
              %s482 = smul.u32 16, %s479
              %s483 = scalar_lea.vmem %s401, %s482
              // While loop
              $region52: #{upsample_conv.1} parent=43 // loop_pre_header
                _
              $region53: #{upsample_conv.1} parent=43 // loop_header
                %s485 = sphi 0, %s487
                %p486 = scmp.ge.s32.totalorder %s485, %s478
                %s490 = sphi 0, %s499
                %s491 = sphi %s481, %s502
                %s492 = sphi %s483, %s503
              $region54: #{upsample_conv.1} parent=43 // loop_header_branch
                %489 = sbr.rel (%p486) target = $region58
              $region55: #{upsample_conv.1} parent=43 // loop_body
                %v493 = vld [vmem:[%s491] sm:$0xff]
                %494 = vst [vmem:[%s492] sm:$0xff] %v493
                %v495 = vld [vmem:[%s491 + $0x8] sm:$0xff]
                %496 = vst [vmem:[%s492 + $0x8] sm:$0xff] %v495
                %s497 = sadd.s32 1, %s490
                %p498 = scmp.ge.s32.totalorder %s497, %s478
                %s499 = scalar_select %p498, 0, %s497
                %s500 = smul.u32 %s499, 16
                %s501 = smul.u32 %s499, 16
                %s502 = scalar_lea.vmem %s481, %s500 [#allocation2]
                %s503 = scalar_lea.vmem %s483, %s501
              $region56: #{upsample_conv.1} parent=43 // loop_footer
                %s487 = sadd.s32 %s485, 1
              $region57: #{upsample_conv.1} parent=43 // loop_footer_branch
                %484 = sbr.rel target = $region53
              $region58: #{upsample_conv.1} parent=43 // loop_exit
                _
            $region44: #{upsample_conv.1} parent=39 // pred_fallthru
              _
            // Predicated region
            $region59: #{upsample_conv.1} parent=39 // pred_check
              _
            $region60: #{upsample_conv.1} parent=39 // pred_check_branch
              %505 = sbr.rel target = $region62
            $region61: #{upsample_conv.1} parent=39 // pred_region
              _
            $region62: #{upsample_conv.1} parent=39 // pred_fallthru
              _
          $region40: #{upsample_conv.1} parent=35 // pred_fallthru
            _
          %506 = vnop
        $region36: #{upsample_conv.1} parent=31 // pred_fallthru
          _
      $region32: #{upsample_conv.1} parent=5 // pred_fallthru
        _
      %p507 = scmp.le.s32.totalorder 2, %s9
      // Predicated region
      $region63: #{upsample_conv.1} parent=5 // pred_check
        %p508 = pneg %p507
      $region64: #{upsample_conv.1} parent=5 // pred_check_branch
        %510 = sbr.rel (%p508) target = $region66
      $region65: #{upsample_conv.1} parent=5 // pred_region
        %s511 = ssub.s32 %s9, 2
        // Predicated region
        $region67: #{upsample_conv.1} parent=65 // pred_check
          %p512 = pneg %p106
        $region68: #{upsample_conv.1} parent=65 // pred_check_branch
          %514 = sbr.rel (%p512) target = $region70
        $region69: #{upsample_conv.1} parent=65 // pred_region
          %s515 = sand.u32 %s91, 1
          %s516 = sand.u32 %s91, 1
          %s517 = smul.addr %s516, 208
          %s518 = scalar_lea.vmem [#allocation2], %s517
        $region70: #{upsample_conv.1} parent=65 // pred_fallthru
          _
      $region66: #{upsample_conv.1} parent=5 // pred_fallthru
        _
    $region6: #{upsample_conv.1} parent=1 // loop_footer
      %s13 = sadd.s32 1, %s9
    $region7: #{upsample_conv.1} parent=1 // loop_footer_branch
      %8 = sbr.rel target = $region3
    $region8: #{upsample_conv.1} parent=1 // loop_exit
      _

</llo_original>
